<compile_context>
chip_gen: v5e
topology: v5e:2x2
jax: 0.10.0
libtpu: 0.0.40
codegen_flags: <defaults>
</compile_context>

<pallas_src>
import jax
import jax.numpy as jnp
from jax.experimental import pallas as pl
from jax.experimental.pallas import tpu as pltpu


def _round_up(x, m):
    return (x + m - 1) // m * m


# ----------------------------------------------------------------------------
# Wrapper reproducing torch.nn.functional.conv1d semantics for cfloat tensors.
# ----------------------------------------------------------------------------
def cconv1d(x_r, x_i, w_r, w_i, bias_r=None, bias_i=None, *,
            stride=1, padding=0, dilation=1, groups=1):
    """Complex conv1d.

    x_*: (N, Cin, L) float32        (real / imag parts, NCL layout)
    w_*: (Cout, Cin//groups, K) float32
    bias_*: (Cout,) float32 or None
    Returns (out_r, out_i), each (N, Cout, L_out).
    """
    N_b, Cin, L = x_r.shape
    Cout, Cin_g, Ks = w_r.shape
    assert Cin % groups == 0 and Cout % groups == 0
    assert Cin // groups == Cin_g
    G = groups
    Cout_g = Cout // G
    s, d = stride, dilation

    L_out = (L + 2 * padding - d * (Ks - 1) - 1) // s + 1
    assert L_out > 0

    # ------------------------------------------------------------------ sizes
    Cin_g_p = _round_up(max(Cin_g, 1), 16)     # contraction dim / x sublanes
    Np = _round_up(max(Cout_g, 1), 8)          # output-channel sublanes (f32)

    tap_off = [(k * d) // s for k in range(Ks)]   # per-tap column offsets
    o_max = max(tap_off)
    HW = _round_up(max(o_max, 1), 128)            # halo width (lanes)

    # Output-column tile TL: lane dim of every matmul and every store.
    # Footprint-driven (a few MiB of pipelined working set on every TPU
    # generation), multiple of 128 and of HW so stores are unmasked and the
    # halo block index stays integral.
    bytes_per_col = 2 * s * Cin_g_p * 2 + 2 * Np * 4
    TL = max(128, min(2048, ((4 << 20) // max(bytes_per_col, 1)) // 128 * 128))
    TL = min(TL, _round_up(L_out, 128))
    TL = _round_up(max(TL, HW), HW)
    Lt = pl.cdiv(L_out, TL)
    Lo_p = Lt * TL
    halo_step = TL // HW

    # Stride is handled by a phase decomposition of the (padded) length axis:
    #   x_ph[n, g, p, c, j] = x_pad[n, g*Cin_g + c, j*s + p]
    Lp = L + 2 * padding
    Lps = -(-Lp // s)                 # ceil(Lp / s)
    Lp_tot = Lps * s
    Lxp = _round_up(max(Lps, Lt * TL + HW), TL)

    # --------------------------------------------------- wrapper-side packing
    # One fused pad/reshape/cast pass over x (for stride==1 the transpose is a
    # no-op move of a size-1 axis) — no Ks-fold expansion, no [Ar|Ai] concat.
    def prep_x(x):
        xp = jnp.pad(x, ((0, 0), (0, 0), (padding, padding + (Lp_tot - Lp))))
        xp = xp.reshape(N_b, G, Cin_g, Lps, s)
        xp = jnp.transpose(xp, (0, 1, 4, 2, 3))        # (N, G, s, Cin_g, Lps)
        xp = jnp.pad(xp, ((0, 0), (0, 0), (0, 0),
                          (0, Cin_g_p - Cin_g), (0, Lxp - Lps)))
        return xp.astype(jnp.bfloat16)

    xr_p = prep_x(x_r)
    xi_p = prep_x(x_i)

    def prep_w(w):
        wg = w.reshape(G, Cout_g, Cin_g, Ks)
        wg = jnp.transpose(wg, (0, 3, 1, 2))           # (G, Ks, Cout_g, Cin_g)
        wg = jnp.pad(wg, ((0, 0), (0, 0),
                          (0, Np - Cout_g), (0, Cin_g_p - Cin_g)))
        return wg.astype(jnp.bfloat16)

    wr_p = prep_w(w_r)
    wi_p = prep_w(w_i)

    if bias_r is None:
        bias_r = jnp.zeros((Cout,), jnp.float32)
        bias_i = jnp.zeros((Cout,), jnp.float32)
    b = jnp.stack([bias_r.astype(jnp.float32).reshape(G, Cout_g),
                   bias_i.astype(jnp.float32).reshape(G, Cout_g)], axis=1)
    b_p = jnp.pad(b, ((0, 0), (0, 0), (0, Np - Cout_g)))[..., None]   # (G,2,Np,1)

    # ------------------------------------------------------------- the kernel
    def kernel(xr_ref, xrh_ref, xi_ref, xih_ref, wr_ref, wi_ref, b_ref,
               o_r_ref, o_i_ref):
        # init output block with the (real / imag) bias, broadcast over lanes
        o_r_ref[...] = jnp.broadcast_to(b_ref[0], (Np, TL))
        o_i_ref[...] = jnp.broadcast_to(b_ref[1], (Np, TL))

        # main tile + right halo, concatenated once at a 128-aligned boundary
        x_r_full = jnp.concatenate([xr_ref[...], xrh_ref[...]], axis=-1)
        x_i_full = jnp.concatenate([xi_ref[...], xih_ref[...]], axis=-1)

        for k in range(Ks):                 # static unroll over the taps
            q = (k * d) % s                 # stride phase (static)
            off = (k * d) // s              # column offset inside the tile
            xr_w = x_r_full[q, :, off:off + TL]          # (Cin_g_p, TL)
            xi_w = x_i_full[q, :, off:off + TL]
            wr_k = wr_ref[k]                              # (Np, Cin_g_p)
            wi_k = wi_ref[k]
            o_r_ref[...] += (
                jnp.dot(wr_k, xr_w, preferred_element_type=jnp.float32)
                - jnp.dot(wi_k, xi_w, preferred_element_type=jnp.float32))
            o_i_ref[...] += (
                jnp.dot(wi_k, xr_w, preferred_element_type=jnp.float32)
                + jnp.dot(wr_k, xi_w, preferred_element_type=jnp.float32))

    # ------------------------------------------------------------- grid/specs
    grid = (G, N_b, Lt)

    x_main_spec = pl.BlockSpec((None, None, s, Cin_g_p, TL),
                               lambda g, n, l: (n, g, 0, 0, l))
    x_halo_spec = pl.BlockSpec((None, None, s, Cin_g_p, HW),
                               lambda g, n, l: (n, g, 0, 0, (l + 1) * halo_step))
    w_spec = pl.BlockSpec((None, Ks, Np, Cin_g_p), lambda g, n, l: (g, 0, 0, 0))
    b_spec = pl.BlockSpec((None, 2, Np, 1), lambda g, n, l: (g, 0, 0, 0))
    o_spec = pl.BlockSpec((None, None, Np, TL), lambda g, n, l: (n, g, 0, l))

    # explicit VMEM budget derived from the actual tile footprint
    blk_bytes = (
        2 * 2 * s * Cin_g_p * TL * 2          # xr/xi main (double buffered)
        + 2 * 2 * s * Cin_g_p * HW * 2        # xr/xi halo
        + 2 * 2 * Ks * Np * Cin_g_p * 2       # weights
        + 2 * 2 * 2 * Np * 4                  # bias
        + 2 * 2 * Np * TL * 4                 # outputs
        + 2 * s * Cin_g_p * (TL + HW) * 2)    # in-kernel concat temporaries
    try:
        vmem_cap = pltpu.get_tpu_info().vmem_capacity_bytes
    except Exception:
        vmem_cap = 64 * 1024 * 1024
    vmem_limit = int(min(vmem_cap - (4 << 20),
                         max(2 * blk_bytes + (2 << 20), 32 << 20)))

    flops = 2 * G * N_b * Lt * Ks * 4 * Np * Cin_g_p * TL
    bytes_accessed = int(
        (xr_p.size + xi_p.size) * 2 * (1.0 + HW / TL)
        + (wr_p.size + wi_p.size) * 2
        + b_p.size * 4
        + 2 * N_b * G * Np * Lo_p * 4)

    out_r_pad, out_i_pad = pl.pallas_call(
        kernel,
        out_shape=(
            jax.ShapeDtypeStruct((N_b, G, Np, Lo_p), jnp.float32),
            jax.ShapeDtypeStruct((N_b, G, Np, Lo_p), jnp.float32),
        ),
        grid_spec=pltpu.PrefetchScalarGridSpec(
            num_scalar_prefetch=0,
            grid=grid,
            in_specs=[x_main_spec, x_halo_spec,     # x real  (main + halo)
                      x_main_spec, x_halo_spec,     # x imag  (main + halo)
                      w_spec, w_spec, b_spec],
            out_specs=[o_spec, o_spec],
        ),
        compiler_params=pltpu.CompilerParams(
            dimension_semantics=("parallel", "parallel", "parallel"),
            vmem_limit_bytes=vmem_limit,
        ),
        cost_estimate=pl.CostEstimate(
            flops=int(flops), transcendentals=0,
            bytes_accessed=int(bytes_accessed)),
    )(xr_p, xr_p, xi_p, xi_p, wr_p, wi_p, b_p)

    # outputs are already channel-major (NCL): just drop padding and merge the
    # (group, channel-in-group) axes — no full-output transpose.
    out_r = out_r_pad[:, :, :Cout_g, :L_out].reshape(N_b, Cout, L_out)
    out_i = out_i_pad[:, :, :Cout_g, :L_out].reshape(N_b, Cout, L_out)
    return out_r, out_i


# ----------------------------------------------------------------------------
# Demo / correctness check
# ----------------------------------------------------------------------------
if __name__ == "__main__":
    key = jax.random.PRNGKey(0)
    ks = jax.random.split(key, 8)

    def reference(x_r, x_i, w_r, w_i, b_r, b_i, stride, padding, dilation, groups):
        xc = (x_r + 1j * x_i).astype(jnp.complex64)
        wc = (w_r + 1j * w_i).astype(jnp.complex64)
        ref = jax.lax.conv_general_dilated(
            xc, wc, window_strides=(stride,), padding=[(padding, padding)],
            rhs_dilation=(dilation,), feature_group_count=groups,
            dimension_numbers=("NCH", "OIH", "NCH"))
        if b_r is not None:
            ref = ref + (b_r + 1j * b_i)[None, :, None]
        return ref

    # Test 1: mirrors cConv1d(4, 8, kernel_size=3, stride=1, padding=1,
    #         bias=True, dilation=1, groups=1) applied to a real input
    #         (the module promotes real -> complex with zero imaginary part).
    N_b, Cin, L, Cout, Ks = 2, 4, 16, 8, 3
    stride, padding, dilation, groups = 1, 1, 1, 1
    w_r = jax.random.normal(ks[0], (Cout, Cin // groups, Ks), jnp.float32)
    w_i = jax.random.normal(ks[1], (Cout, Cin // groups, Ks), jnp.float32)
    b_r = jax.random.normal(ks[2], (Cout,), jnp.float32)
    b_i = jax.random.normal(ks[3], (Cout,), jnp.float32)
    x_r = jax.random.normal(ks[4], (N_b, Cin, L), jnp.float32)
    x_i = jnp.zeros_like(x_r)

    out_r, out_i = cconv1d(x_r, x_i, w_r, w_i, b_r, b_i,
                           stride=stride, padding=padding,
                           dilation=dilation, groups=groups)
    jax.block_until_ready((out_r, out_i))
    ref = reference(x_r, x_i, w_r, w_i, b_r, b_i, stride, padding, dilation, groups)
    assert out_r.shape == ref.shape
    # bf16 MXU inputs with f32 accumulation -> relaxed tolerance.
    assert jnp.allclose(out_r, ref.real, atol=5e-2, rtol=5e-2)
    assert jnp.allclose(out_i, ref.imag, atol=5e-2, rtol=5e-2)

    # Test 2: grouped / strided complex input, no bias.
    N_b, Cin, L, Cout, Ks = 2, 4, 16, 8, 3
    stride, padding, dilation, groups = 2, 1, 1, 2
    w_r = jax.random.normal(ks[5], (Cout, Cin // groups, Ks), jnp.float32)
    w_i = jax.random.normal(ks[6], (Cout, Cin // groups, Ks), jnp.float32)
    x2 = jax.random.normal(ks[7], (2, N_b, Cin, L), jnp.float32)
    x_r2, x_i2 = x2[0], x2[1]

    out_r2, out_i2 = cconv1d(x_r2, x_i2, w_r, w_i, None, None,
                             stride=stride, padding=padding,
                             dilation=dilation, groups=groups)
    jax.block_until_ready((out_r2, out_i2))
    ref2 = reference(x_r2, x_i2, w_r, w_i, None, None,
                     stride, padding, dilation, groups)
    assert out_r2.shape == ref2.shape
    assert jnp.allclose(out_r2, ref2.real, atol=5e-2, rtol=5e-2)
    assert jnp.allclose(out_i2, ref2.imag, atol=5e-2, rtol=5e-2)

    print("KERNEL_OK")
</pallas_src>

<mosaic_0001>
module attributes {stable_mosaic.version = 11 : i64} {
  func.func @kernel(%arg0: i32, %arg1: i32, %arg2: i32, %arg3: memref<1x1x1x16x128xbf16, #tpu.memory_space<vmem>>, %arg4: memref<1x1x1x16x128xbf16, #tpu.memory_space<vmem>>, %arg5: memref<1x1x1x16x128xbf16, #tpu.memory_space<vmem>>, %arg6: memref<1x1x1x16x128xbf16, #tpu.memory_space<vmem>>, %arg7: memref<1x3x8x16xbf16, #tpu.memory_space<vmem>>, %arg8: memref<1x3x8x16xbf16, #tpu.memory_space<vmem>>, %arg9: memref<1x2x8x1xf32, #tpu.memory_space<vmem>>, %arg10: memref<1x1x8x128xf32, #tpu.memory_space<vmem>>, %arg11: memref<1x1x8x128xf32, #tpu.memory_space<vmem>>) attributes {dimension_semantics = [#tpu.dimension_semantics<parallel>, #tpu.dimension_semantics<parallel>, #tpu.dimension_semantics<parallel>], iteration_bounds = array<i64: 1, 2, 1>, scalar_prefetch = 0 : i64, scratch_operands = 0 : i64, tpu.core_type = #tpu.core_type<tc>, window_params = [{transform_indices = @transform_0, window_bounds = array<i64: 1, 1, 1, 16, 128>}, {transform_indices = @transform_1, window_bounds = array<i64: 1, 1, 1, 16, 128>}, {transform_indices = @transform_2, window_bounds = array<i64: 1, 1, 1, 16, 128>}, {transform_indices = @transform_3, window_bounds = array<i64: 1, 1, 1, 16, 128>}, {transform_indices = @transform_4, window_bounds = array<i64: 1, 3, 8, 16>}, {transform_indices = @transform_5, window_bounds = array<i64: 1, 3, 8, 16>}, {transform_indices = @transform_6, window_bounds = array<i64: 1, 2, 8, 1>}, {transform_indices = @transform_7, window_bounds = array<i64: 1, 1, 8, 128>}, {transform_indices = @transform_8, window_bounds = array<i64: 1, 1, 8, 128>}]} {
    %c0 = arith.constant 0 : index
    %c0_0 = arith.constant 0 : index
    %c0_1 = arith.constant 0 : index
    %c0_2 = arith.constant 0 : index
    %0 = vector.load %arg9[%c0, %c0_0, %c0_1, %c0_2] : memref<1x2x8x1xf32, #tpu.memory_space<vmem>>, vector<1x1x8x1xf32>
    %1 = vector.shape_cast %0 : vector<1x1x8x1xf32> to vector<8x1xf32>
    %2 = vector.shape_cast %1 : vector<8x1xf32> to vector<8x1xf32>
    %3 = vector.broadcast %2 : vector<8x1xf32> to vector<8x128xf32>
    %c0_3 = arith.constant 0 : index
    %c0_4 = arith.constant 0 : index
    %c0_5 = arith.constant 0 : index
    %c0_6 = arith.constant 0 : index
    %4 = vector.load %arg10[%c0_3, %c0_4, %c0_5, %c0_6] : memref<1x1x8x128xf32, #tpu.memory_space<vmem>>, vector<1x1x8x128xf32>
    %5 = vector.shape_cast %4 : vector<1x1x8x128xf32> to vector<8x128xf32>
    %6 = vector.shape_cast %3 : vector<8x128xf32> to vector<1x1x8x128xf32>
    tpu.vector_store %arg10[%c0_3, %c0_4, %c0_5, %c0_6], %6 {strides = array<i32>} : memref<1x1x8x128xf32, #tpu.memory_space<vmem>>, vector<1x1x8x128xf32>,
    %c0_7 = arith.constant 0 : index
    %c1 = arith.constant 1 : index
    %c0_8 = arith.constant 0 : index
    %c0_9 = arith.constant 0 : index
    %7 = vector.load %arg9[%c0_7, %c1, %c0_8, %c0_9] : memref<1x2x8x1xf32, #tpu.memory_space<vmem>>, vector<1x1x8x1xf32>
    %8 = vector.shape_cast %7 : vector<1x1x8x1xf32> to vector<8x1xf32>
    %9 = vector.shape_cast %8 : vector<8x1xf32> to vector<8x1xf32>
    %10 = vector.broadcast %9 : vector<8x1xf32> to vector<8x128xf32>
    %c0_10 = arith.constant 0 : index
    %c0_11 = arith.constant 0 : index
    %c0_12 = arith.constant 0 : index
    %c0_13 = arith.constant 0 : index
    %11 = vector.load %arg11[%c0_10, %c0_11, %c0_12, %c0_13] : memref<1x1x8x128xf32, #tpu.memory_space<vmem>>, vector<1x1x8x128xf32>
    %12 = vector.shape_cast %11 : vector<1x1x8x128xf32> to vector<8x128xf32>
    %13 = vector.shape_cast %10 : vector<8x128xf32> to vector<1x1x8x128xf32>
    tpu.vector_store %arg11[%c0_10, %c0_11, %c0_12, %c0_13], %13 {strides = array<i32>} : memref<1x1x8x128xf32, #tpu.memory_space<vmem>>, vector<1x1x8x128xf32>,
    %c0_14 = arith.constant 0 : index
    %c0_15 = arith.constant 0 : index
    %c0_16 = arith.constant 0 : index
    %c0_17 = arith.constant 0 : index
    %c0_18 = arith.constant 0 : index
    %14 = vector.load %arg3[%c0_14, %c0_15, %c0_16, %c0_17, %c0_18] : memref<1x1x1x16x128xbf16, #tpu.memory_space<vmem>>, vector<1x1x1x16x128xbf16>
    %15 = vector.shape_cast %14 : vector<1x1x1x16x128xbf16> to vector<1x16x128xbf16>
    %c0_19 = arith.constant 0 : index
    %c0_20 = arith.constant 0 : index
    %c0_21 = arith.constant 0 : index
    %c0_22 = arith.constant 0 : index
    %c0_23 = arith.constant 0 : index
    %16 = vector.load %arg4[%c0_19, %c0_20, %c0_21, %c0_22, %c0_23] : memref<1x1x1x16x128xbf16, #tpu.memory_space<vmem>>, vector<1x1x1x16x128xbf16>
    %17 = vector.shape_cast %16 : vector<1x1x1x16x128xbf16> to vector<1x16x128xbf16>
    %18 = tpu.concatenate %15, %17 in 2 : vector<1x16x128xbf16>, vector<1x16x128xbf16> -> vector<1x16x256xbf16>
    %c0_24 = arith.constant 0 : index
    %c0_25 = arith.constant 0 : index
    %c0_26 = arith.constant 0 : index
    %c0_27 = arith.constant 0 : index
    %c0_28 = arith.constant 0 : index
    %19 = vector.load %arg5[%c0_24, %c0_25, %c0_26, %c0_27, %c0_28] : memref<1x1x1x16x128xbf16, #tpu.memory_space<vmem>>, vector<1x1x1x16x128xbf16>
    %20 = vector.shape_cast %19 : vector<1x1x1x16x128xbf16> to vector<1x16x128xbf16>
    %c0_29 = arith.constant 0 : index
    %c0_30 = arith.constant 0 : index
    %c0_31 = arith.constant 0 : index
    %c0_32 = arith.constant 0 : index
    %c0_33 = arith.constant 0 : index
    %21 = vector.load %arg6[%c0_29, %c0_30, %c0_31, %c0_32, %c0_33] : memref<1x1x1x16x128xbf16, #tpu.memory_space<vmem>>, vector<1x1x1x16x128xbf16>
    %22 = vector.shape_cast %21 : vector<1x1x1x16x128xbf16> to vector<1x16x128xbf16>
    %23 = tpu.concatenate %20, %22 in 2 : vector<1x16x128xbf16>, vector<1x16x128xbf16> -> vector<1x16x256xbf16>
    %24 = vector.extract_strided_slice %18 {offsets = [0, 0, 0], sizes = [1, 16, 128], strides = [1, 1, 1]} : vector<1x16x256xbf16> to vector<1x16x128xbf16>
    %25 = vector.shape_cast %24 : vector<1x16x128xbf16> to vector<16x128xbf16>
    %26 = vector.extract_strided_slice %23 {offsets = [0, 0, 0], sizes = [1, 16, 128], strides = [1, 1, 1]} : vector<1x16x256xbf16> to vector<1x16x128xbf16>
    %27 = vector.shape_cast %26 : vector<1x16x128xbf16> to vector<16x128xbf16>
    %c0_34 = arith.constant 0 : index
    %c0_35 = arith.constant 0 : index
    %c0_36 = arith.constant 0 : index
    %c0_37 = arith.constant 0 : index
    %28 = vector.load %arg7[%c0_34, %c0_35, %c0_36, %c0_37] : memref<1x3x8x16xbf16, #tpu.memory_space<vmem>>, vector<1x1x8x16xbf16>
    %29 = vector.shape_cast %28 : vector<1x1x8x16xbf16> to vector<8x16xbf16>
    %c0_38 = arith.constant 0 : index
    %c0_39 = arith.constant 0 : index
    %c0_40 = arith.constant 0 : index
    %c0_41 = arith.constant 0 : index
    %30 = vector.load %arg8[%c0_38, %c0_39, %c0_40, %c0_41] : memref<1x3x8x16xbf16, #tpu.memory_space<vmem>>, vector<1x1x8x16xbf16>
    %31 = vector.shape_cast %30 : vector<1x1x8x16xbf16> to vector<8x16xbf16>
    %c0_42 = arith.constant 0 : index
    %c0_43 = arith.constant 0 : index
    %c0_44 = arith.constant 0 : index
    %c0_45 = arith.constant 0 : index
    %32 = vector.load %arg10[%c0_42, %c0_43, %c0_44, %c0_45] : memref<1x1x8x128xf32, #tpu.memory_space<vmem>>, vector<1x1x8x128xf32>
    %33 = vector.shape_cast %32 : vector<1x1x8x128xf32> to vector<8x128xf32>
    %cst = arith.constant dense<0.000000e+00> : vector<8x128xf32>
    %34 = tpu.matmul %29, %25, %cst {dimension_numbers = #tpu.dot_dimension_numbers<[1], [0], [0], [1], [0, 0, 1, 1], [], []>} : vector<8x16xbf16>, vector<16x128xbf16>, vector<8x128xf32> -> vector<8x128xf32>
    %cst_46 = arith.constant dense<0.000000e+00> : vector<8x128xf32>
    %35 = tpu.matmul %31, %27, %cst_46 {dimension_numbers = #tpu.dot_dimension_numbers<[1], [0], [0], [1], [0, 0, 1, 1], [], []>} : vector<8x16xbf16>, vector<16x128xbf16>, vector<8x128xf32> -> vector<8x128xf32>
    %36 = arith.subf %34, %35 : vector<8x128xf32>
    %37 = arith.addf %33, %36 : vector<8x128xf32>
    %c0_47 = arith.constant 0 : index
    %c0_48 = arith.constant 0 : index
    %c0_49 = arith.constant 0 : index
    %c0_50 = arith.constant 0 : index
    %38 = vector.load %arg10[%c0_47, %c0_48, %c0_49, %c0_50] : memref<1x1x8x128xf32, #tpu.memory_space<vmem>>, vector<1x1x8x128xf32>
    %39 = vector.shape_cast %38 : vector<1x1x8x128xf32> to vector<8x128xf32>
    %40 = vector.shape_cast %37 : vector<8x128xf32> to vector<1x1x8x128xf32>
    tpu.vector_store %arg10[%c0_47, %c0_48, %c0_49, %c0_50], %40 {strides = array<i32>} : memref<1x1x8x128xf32, #tpu.memory_space<vmem>>, vector<1x1x8x128xf32>,
    %c0_51 = arith.constant 0 : index
    %c0_52 = arith.constant 0 : index
    %c0_53 = arith.constant 0 : index
    %c0_54 = arith.constant 0 : index
    %41 = vector.load %arg11[%c0_51, %c0_52, %c0_53, %c0_54] : memref<1x1x8x128xf32, #tpu.memory_space<vmem>>, vector<1x1x8x128xf32>
    %42 = vector.shape_cast %41 : vector<1x1x8x128xf32> to vector<8x128xf32>
    %cst_55 = arith.constant dense<0.000000e+00> : vector<8x128xf32>
    %43 = tpu.matmul %31, %25, %cst_55 {dimension_numbers = #tpu.dot_dimension_numbers<[1], [0], [0], [1], [0, 0, 1, 1], [], []>} : vector<8x16xbf16>, vector<16x128xbf16>, vector<8x128xf32> -> vector<8x128xf32>
    %cst_56 = arith.constant dense<0.000000e+00> : vector<8x128xf32>
    %44 = tpu.matmul %29, %27, %cst_56 {dimension_numbers = #tpu.dot_dimension_numbers<[1], [0], [0], [1], [0, 0, 1, 1], [], []>} : vector<8x16xbf16>, vector<16x128xbf16>, vector<8x128xf32> -> vector<8x128xf32>
    %45 = arith.addf %43, %44 : vector<8x128xf32>
    %46 = arith.addf %42, %45 : vector<8x128xf32>
    %c0_57 = arith.constant 0 : index
    %c0_58 = arith.constant 0 : index
    %c0_59 = arith.constant 0 : index
    %c0_60 = arith.constant 0 : index
    %47 = vector.load %arg11[%c0_57, %c0_58, %c0_59, %c0_60] : memref<1x1x8x128xf32, #tpu.memory_space<vmem>>, vector<1x1x8x128xf32>
    %48 = vector.shape_cast %47 : vector<1x1x8x128xf32> to vector<8x128xf32>
    %49 = vector.shape_cast %46 : vector<8x128xf32> to vector<1x1x8x128xf32>
    tpu.vector_store %arg11[%c0_57, %c0_58, %c0_59, %c0_60], %49 {strides = array<i32>} : memref<1x1x8x128xf32, #tpu.memory_space<vmem>>, vector<1x1x8x128xf32>,
    %50 = vector.extract_strided_slice %18 {offsets = [0, 0, 1], sizes = [1, 16, 128], strides = [1, 1, 1]} : vector<1x16x256xbf16> to vector<1x16x128xbf16>
    %51 = vector.shape_cast %50 : vector<1x16x128xbf16> to vector<16x128xbf16>
    %52 = vector.extract_strided_slice %23 {offsets = [0, 0, 1], sizes = [1, 16, 128], strides = [1, 1, 1]} : vector<1x16x256xbf16> to vector<1x16x128xbf16>
    %53 = vector.shape_cast %52 : vector<1x16x128xbf16> to vector<16x128xbf16>
    %c0_61 = arith.constant 0 : index
    %c1_62 = arith.constant 1 : index
    %c0_63 = arith.constant 0 : index
    %c0_64 = arith.constant 0 : index
    %54 = vector.load %arg7[%c0_61, %c1_62, %c0_63, %c0_64] : memref<1x3x8x16xbf16, #tpu.memory_space<vmem>>, vector<1x1x8x16xbf16>
    %55 = vector.shape_cast %54 : vector<1x1x8x16xbf16> to vector<8x16xbf16>
    %c0_65 = arith.constant 0 : index
    %c1_66 = arith.constant 1 : index
    %c0_67 = arith.constant 0 : index
    %c0_68 = arith.constant 0 : index
    %56 = vector.load %arg8[%c0_65, %c1_66, %c0_67, %c0_68] : memref<1x3x8x16xbf16, #tpu.memory_space<vmem>>, vector<1x1x8x16xbf16>
    %57 = vector.shape_cast %56 : vector<1x1x8x16xbf16> to vector<8x16xbf16>
    %c0_69 = arith.constant 0 : index
    %c0_70 = arith.constant 0 : index
    %c0_71 = arith.constant 0 : index
    %c0_72 = arith.constant 0 : index
    %58 = vector.load %arg10[%c0_69, %c0_70, %c0_71, %c0_72] : memref<1x1x8x128xf32, #tpu.memory_space<vmem>>, vector<1x1x8x128xf32>
    %59 = vector.shape_cast %58 : vector<1x1x8x128xf32> to vector<8x128xf32>
    %cst_73 = arith.constant dense<0.000000e+00> : vector<8x128xf32>
    %60 = tpu.matmul %55, %51, %cst_73 {dimension_numbers = #tpu.dot_dimension_numbers<[1], [0], [0], [1], [0, 0, 1, 1], [], []>} : vector<8x16xbf16>, vector<16x128xbf16>, vector<8x128xf32> -> vector<8x128xf32>
    %cst_74 = arith.constant dense<0.000000e+00> : vector<8x128xf32>
    %61 = tpu.matmul %57, %53, %cst_74 {dimension_numbers = #tpu.dot_dimension_numbers<[1], [0], [0], [1], [0, 0, 1, 1], [], []>} : vector<8x16xbf16>, vector<16x128xbf16>, vector<8x128xf32> -> vector<8x128xf32>
    %62 = arith.subf %60, %61 : vector<8x128xf32>
    %63 = arith.addf %59, %62 : vector<8x128xf32>
    %c0_75 = arith.constant 0 : index
    %c0_76 = arith.constant 0 : index
    %c0_77 = arith.constant 0 : index
    %c0_78 = arith.constant 0 : index
    %64 = vector.load %arg10[%c0_75, %c0_76, %c0_77, %c0_78] : memref<1x1x8x128xf32, #tpu.memory_space<vmem>>, vector<1x1x8x128xf32>
    %65 = vector.shape_cast %64 : vector<1x1x8x128xf32> to vector<8x128xf32>
    %66 = vector.shape_cast %63 : vector<8x128xf32> to vector<1x1x8x128xf32>
    tpu.vector_store %arg10[%c0_75, %c0_76, %c0_77, %c0_78], %66 {strides = array<i32>} : memref<1x1x8x128xf32, #tpu.memory_space<vmem>>, vector<1x1x8x128xf32>,
    %c0_79 = arith.constant 0 : index
    %c0_80 = arith.constant 0 : index
    %c0_81 = arith.constant 0 : index
    %c0_82 = arith.constant 0 : index
    %67 = vector.load %arg11[%c0_79, %c0_80, %c0_81, %c0_82] : memref<1x1x8x128xf32, #tpu.memory_space<vmem>>, vector<1x1x8x128xf32>
    %68 = vector.shape_cast %67 : vector<1x1x8x128xf32> to vector<8x128xf32>
    %cst_83 = arith.constant dense<0.000000e+00> : vector<8x128xf32>
    %69 = tpu.matmul %57, %51, %cst_83 {dimension_numbers = #tpu.dot_dimension_numbers<[1], [0], [0], [1], [0, 0, 1, 1], [], []>} : vector<8x16xbf16>, vector<16x128xbf16>, vector<8x128xf32> -> vector<8x128xf32>
    %cst_84 = arith.constant dense<0.000000e+00> : vector<8x128xf32>
    %70 = tpu.matmul %55, %53, %cst_84 {dimension_numbers = #tpu.dot_dimension_numbers<[1], [0], [0], [1], [0, 0, 1, 1], [], []>} : vector<8x16xbf16>, vector<16x128xbf16>, vector<8x128xf32> -> vector<8x128xf32>
    %71 = arith.addf %69, %70 : vector<8x128xf32>
    %72 = arith.addf %68, %71 : vector<8x128xf32>
    %c0_85 = arith.constant 0 : index
    %c0_86 = arith.constant 0 : index
    %c0_87 = arith.constant 0 : index
    %c0_88 = arith.constant 0 : index
    %73 = vector.load %arg11[%c0_85, %c0_86, %c0_87, %c0_88] : memref<1x1x8x128xf32, #tpu.memory_space<vmem>>, vector<1x1x8x128xf32>
    %74 = vector.shape_cast %73 : vector<1x1x8x128xf32> to vector<8x128xf32>
    %75 = vector.shape_cast %72 : vector<8x128xf32> to vector<1x1x8x128xf32>
    tpu.vector_store %arg11[%c0_85, %c0_86, %c0_87, %c0_88], %75 {strides = array<i32>} : memref<1x1x8x128xf32, #tpu.memory_space<vmem>>, vector<1x1x8x128xf32>,
    %76 = vector.extract_strided_slice %18 {offsets = [0, 0, 2], sizes = [1, 16, 128], strides = [1, 1, 1]} : vector<1x16x256xbf16> to vector<1x16x128xbf16>
    %77 = vector.shape_cast %76 : vector<1x16x128xbf16> to vector<16x128xbf16>
    %78 = vector.extract_strided_slice %23 {offsets = [0, 0, 2], sizes = [1, 16, 128], strides = [1, 1, 1]} : vector<1x16x256xbf16> to vector<1x16x128xbf16>
    %79 = vector.shape_cast %78 : vector<1x16x128xbf16> to vector<16x128xbf16>
    %c0_89 = arith.constant 0 : index
    %c2 = arith.constant 2 : index
    %c0_90 = arith.constant 0 : index
    %c0_91 = arith.constant 0 : index
    %80 = vector.load %arg7[%c0_89, %c2, %c0_90, %c0_91] : memref<1x3x8x16xbf16, #tpu.memory_space<vmem>>, vector<1x1x8x16xbf16>
    %81 = vector.shape_cast %80 : vector<1x1x8x16xbf16> to vector<8x16xbf16>
    %c0_92 = arith.constant 0 : index
    %c2_93 = arith.constant 2 : index
    %c0_94 = arith.constant 0 : index
    %c0_95 = arith.constant 0 : index
    %82 = vector.load %arg8[%c0_92, %c2_93, %c0_94, %c0_95] : memref<1x3x8x16xbf16, #tpu.memory_space<vmem>>, vector<1x1x8x16xbf16>
    %83 = vector.shape_cast %82 : vector<1x1x8x16xbf16> to vector<8x16xbf16>
    %c0_96 = arith.constant 0 : index
    %c0_97 = arith.constant 0 : index
    %c0_98 = arith.constant 0 : index
    %c0_99 = arith.constant 0 : index
    %84 = vector.load %arg10[%c0_96, %c0_97, %c0_98, %c0_99] : memref<1x1x8x128xf32, #tpu.memory_space<vmem>>, vector<1x1x8x128xf32>
    %85 = vector.shape_cast %84 : vector<1x1x8x128xf32> to vector<8x128xf32>
    %cst_100 = arith.constant dense<0.000000e+00> : vector<8x128xf32>
    %86 = tpu.matmul %81, %77, %cst_100 {dimension_numbers = #tpu.dot_dimension_numbers<[1], [0], [0], [1], [0, 0, 1, 1], [], []>} : vector<8x16xbf16>, vector<16x128xbf16>, vector<8x128xf32> -> vector<8x128xf32>
    %cst_101 = arith.constant dense<0.000000e+00> : vector<8x128xf32>
    %87 = tpu.matmul %83, %79, %cst_101 {dimension_numbers = #tpu.dot_dimension_numbers<[1], [0], [0], [1], [0, 0, 1, 1], [], []>} : vector<8x16xbf16>, vector<16x128xbf16>, vector<8x128xf32> -> vector<8x128xf32>
    %88 = arith.subf %86, %87 : vector<8x128xf32>
    %89 = arith.addf %85, %88 : vector<8x128xf32>
    %c0_102 = arith.constant 0 : index
    %c0_103 = arith.constant 0 : index
    %c0_104 = arith.constant 0 : index
    %c0_105 = arith.constant 0 : index
    %90 = vector.load %arg10[%c0_102, %c0_103, %c0_104, %c0_105] : memref<1x1x8x128xf32, #tpu.memory_space<vmem>>, vector<1x1x8x128xf32>
    %91 = vector.shape_cast %90 : vector<1x1x8x128xf32> to vector<8x128xf32>
    %92 = vector.shape_cast %89 : vector<8x128xf32> to vector<1x1x8x128xf32>
    tpu.vector_store %arg10[%c0_102, %c0_103, %c0_104, %c0_105], %92 {strides = array<i32>} : memref<1x1x8x128xf32, #tpu.memory_space<vmem>>, vector<1x1x8x128xf32>,
    %c0_106 = arith.constant 0 : index
    %c0_107 = arith.constant 0 : index
    %c0_108 = arith.constant 0 : index
    %c0_109 = arith.constant 0 : index
    %93 = vector.load %arg11[%c0_106, %c0_107, %c0_108, %c0_109] : memref<1x1x8x128xf32, #tpu.memory_space<vmem>>, vector<1x1x8x128xf32>
    %94 = vector.shape_cast %93 : vector<1x1x8x128xf32> to vector<8x128xf32>
    %cst_110 = arith.constant dense<0.000000e+00> : vector<8x128xf32>
    %95 = tpu.matmul %83, %77, %cst_110 {dimension_numbers = #tpu.dot_dimension_numbers<[1], [0], [0], [1], [0, 0, 1, 1], [], []>} : vector<8x16xbf16>, vector<16x128xbf16>, vector<8x128xf32> -> vector<8x128xf32>
    %cst_111 = arith.constant dense<0.000000e+00> : vector<8x128xf32>
    %96 = tpu.matmul %81, %79, %cst_111 {dimension_numbers = #tpu.dot_dimension_numbers<[1], [0], [0], [1], [0, 0, 1, 1], [], []>} : vector<8x16xbf16>, vector<16x128xbf16>, vector<8x128xf32> -> vector<8x128xf32>
    %97 = arith.addf %95, %96 : vector<8x128xf32>
    %98 = arith.addf %94, %97 : vector<8x128xf32>
    %c0_112 = arith.constant 0 : index
    %c0_113 = arith.constant 0 : index
    %c0_114 = arith.constant 0 : index
    %c0_115 = arith.constant 0 : index
    %99 = vector.load %arg11[%c0_112, %c0_113, %c0_114, %c0_115] : memref<1x1x8x128xf32, #tpu.memory_space<vmem>>, vector<1x1x8x128xf32>
    %100 = vector.shape_cast %99 : vector<1x1x8x128xf32> to vector<8x128xf32>
    %101 = vector.shape_cast %98 : vector<8x128xf32> to vector<1x1x8x128xf32>
    tpu.vector_store %arg11[%c0_112, %c0_113, %c0_114, %c0_115], %101 {strides = array<i32>} : memref<1x1x8x128xf32, #tpu.memory_space<vmem>>, vector<1x1x8x128xf32>,
    return
  }
  func.func @transform_0(%arg0: i32, %arg1: i32, %arg2: i32) -> (i32, i32, i32, i32, i32) {
    %c0_i32 = arith.constant 0 : i32
    %c0_i32_0 = arith.constant 0 : i32
    %c0_i32_1 = arith.constant 0 : i32
    return %arg1, %arg0, %c0_i32, %c0_i32_0, %arg2 : i32, i32, i32, i32, i32
  }
  func.func @transform_1(%arg0: i32, %arg1: i32, %arg2: i32) -> (i32, i32, i32, i32, i32) {
    %c1_i32 = arith.constant 1 : i32
    %0 = arith.addi %arg2, %c1_i32 : i32
    %c1_i32_0 = arith.constant 1 : i32
    %1 = arith.muli %0, %c1_i32_0 : i32
    %c0_i32 = arith.constant 0 : i32
    %c0_i32_1 = arith.constant 0 : i32
    %c0_i32_2 = arith.constant 0 : i32
    return %arg1, %arg0, %c0_i32, %c0_i32_1, %1 : i32, i32, i32, i32, i32
  }
  func.func @transform_2(%arg0: i32, %arg1: i32, %arg2: i32) -> (i32, i32, i32, i32, i32) {
    %c0_i32 = arith.constant 0 : i32
    %c0_i32_0 = arith.constant 0 : i32
    %c0_i32_1 = arith.constant 0 : i32
    return %arg1, %arg0, %c0_i32, %c0_i32_0, %arg2 : i32, i32, i32, i32, i32
  }
  func.func @transform_3(%arg0: i32, %arg1: i32, %arg2: i32) -> (i32, i32, i32, i32, i32) {
    %c1_i32 = arith.constant 1 : i32
    %0 = arith.addi %arg2, %c1_i32 : i32
    %c1_i32_0 = arith.constant 1 : i32
    %1 = arith.muli %0, %c1_i32_0 : i32
    %c0_i32 = arith.constant 0 : i32
    %c0_i32_1 = arith.constant 0 : i32
    %c0_i32_2 = arith.constant 0 : i32
    return %arg1, %arg0, %c0_i32, %c0_i32_1, %1 : i32, i32, i32, i32, i32
  }
  func.func @transform_4(%arg0: i32, %arg1: i32, %arg2: i32) -> (i32, i32, i32, i32) {
    %c0_i32 = arith.constant 0 : i32
    %c0_i32_0 = arith.constant 0 : i32
    %c0_i32_1 = arith.constant 0 : i32
    %c0_i32_2 = arith.constant 0 : i32
    return %arg0, %c0_i32, %c0_i32_0, %c0_i32_1 : i32, i32, i32, i32
  }
  func.func @transform_5(%arg0: i32, %arg1: i32, %arg2: i32) -> (i32, i32, i32, i32) {
    %c0_i32 = arith.constant 0 : i32
    %c0_i32_0 = arith.constant 0 : i32
    %c0_i32_1 = arith.constant 0 : i32
    %c0_i32_2 = arith.constant 0 : i32
    return %arg0, %c0_i32, %c0_i32_0, %c0_i32_1 : i32, i32, i32, i32
  }
  func.func @transform_6(%arg0: i32, %arg1: i32, %arg2: i32) -> (i32, i32, i32, i32) {
    %c0_i32 = arith.constant 0 : i32
    %c0_i32_0 = arith.constant 0 : i32
    %c0_i32_1 = arith.constant 0 : i32
    %c0_i32_2 = arith.constant 0 : i32
    return %arg0, %c0_i32, %c0_i32_0, %c0_i32_1 : i32, i32, i32, i32
  }
  func.func @transform_7(%arg0: i32, %arg1: i32, %arg2: i32) -> (i32, i32, i32, i32) {
    %c0_i32 = arith.constant 0 : i32
    %c0_i32_0 = arith.constant 0 : i32
    return %arg1, %arg0, %c0_i32, %arg2 : i32, i32, i32, i32
  }
  func.func @transform_8(%arg0: i32, %arg1: i32, %arg2: i32) -> (i32, i32, i32, i32) {
    %c0_i32 = arith.constant 0 : i32
    %c0_i32_0 = arith.constant 0 : i32
    return %arg1, %arg0, %c0_i32, %arg2 : i32, i32, i32, i32
  }
}

</mosaic_0001>

<llo_original>
// kernel: tpu_custom_call.1
$region0: #{tpu_custom_call.1}
  #allocation0 [shape = 'u32[]', space=smem, size = 0x4, offset = 0x4, fixed_abs, tag = 'smem constant byte address 0x4 - core index']
  #allocation1 [shape = 'u32[72,128]{1,0:T(1,128)}', space=vmem, size = 0x9000, scoped, tag = 'internal scratch']
  %s0 = inlined_call_operand.hbm [shape: bf16[2,1,1,16,256], index: 0, kind: input, shape index: {}]
  %s1 = inlined_call_operand.hbm [shape: bf16[2,1,1,16,256], index: 1, kind: input, shape index: {}]
  %s2 = inlined_call_operand.hbm [shape: bf16[2,1,1,16,256], index: 2, kind: input, shape index: {}]
  %s3 = inlined_call_operand.hbm [shape: bf16[2,1,1,16,256], index: 3, kind: input, shape index: {}]
  %s4 = inlined_call_operand.vmem [shape: bf16[1,3,8,16], index: 4, kind: input, shape index: {}]
  %s5 = inlined_call_operand.hbm [shape: bf16[1,3,8,16], index: 5, kind: input, shape index: {}]
  %s6 = inlined_call_operand.vmem [shape: f32[1,2,8,1], index: 6, kind: input, shape index: {}]
  %s7 = inlined_call_operand.hbm [shape: f32[2,1,8,128], index: 7, kind: output, shape index: {0}]
  %s8 = inlined_call_operand.hbm [shape: f32[2,1,8,128], index: 8, kind: output, shape index: {1}]
  %9 = xla_tuple %s7, %s8
  %s10 = sld [smem:[#allocation0]]
  $region89: #{tpu_custom_call.1} parent=0
    _
  %s12 = ssub.s32 1, %s10
  %s13 = scalar_select 0, %s12, %s10
  $region1: #{tpu_custom_call.1} parent=0
    #allocation2 [shape = 'u8[8192]{0}', space=vmem, size = 0x2000, scoped, tag = 'input window, operand 0']
    #allocation3 [shape = 's32[2]{0}', space=sflag, size = 0x8, scoped, tag = 'scoped memory for tpu_custom_call.1']
    #allocation4 [shape = 's32[2]{0}', space=sflag, size = 0x8, scoped, tag = 'scoped memory for tpu_custom_call.1']
    #allocation5 [shape = 'u8[8192]{0}', space=vmem, size = 0x2000, scoped, tag = 'input window, operand 1']
    #allocation6 [shape = 's32[2]{0}', space=sflag, size = 0x8, scoped, tag = 'scoped memory for tpu_custom_call.1']
    #allocation7 [shape = 'u8[8192]{0}', space=vmem, size = 0x2000, scoped, tag = 'input window, operand 2']
    #allocation8 [shape = 'u8[8192]{0}', space=vmem, size = 0x2000, scoped, tag = 'input window, operand 3']
    #allocation9 [shape = 's32[2]{0}', space=sflag, size = 0x8, scoped, tag = 'scoped memory for tpu_custom_call.1']
    #allocation10 [shape = 'u8[6144]{0}', space=vmem, size = 0x1800, scoped, tag = 'input window, operand 5, single buffered']
    #allocation11 [shape = 'u8[8192]{0}', space=vmem, size = 0x2000, scoped, tag = 'output window, operand 0']
    #allocation12 [shape = 'u8[8192]{0}', space=vmem, size = 0x2000, scoped, tag = 'output window, operand 1']
    #allocation13 [shape = 's32[2]{0}', space=sflag, size = 0x8, scoped, tag = 'scoped memory for tpu_custom_call.1']
    %14 = vsyncpa [#allocation3], 0
    %s15 = scalar_lea.sflag [#allocation3], 1
    %16 = vsyncpa %s15, 0
    %17 = vsyncpa [#allocation6], 0
    %s18 = scalar_lea.sflag [#allocation6], 1
    %19 = vsyncpa %s18, 0
    %20 = vsyncpa [#allocation9], 0
    %s21 = scalar_lea.sflag [#allocation9], 1
    %22 = vsyncpa %s21, 0
    %23 = vsyncpa [#allocation4], 0
    %s24 = scalar_lea.sflag [#allocation4], 1
    %25 = vsyncpa %s24, 0
    %26 = vsyncpa [#allocation13], 0
    %s27 = scalar_lea.sflag [#allocation13], 1
    %28 = vsyncpa %s27, 0
    loop: start=0, step=1, limit=4
    $region2: #{tpu_custom_call.1} parent=1 // loop_pre_header
      _
    $region3: #{tpu_custom_call.1} parent=1 // loop_header
      %s30 = sphi 0, %s34
      %p31 = scmp.ge.s32.totalorder %s30, 4
      %s37 = sphi 0, %s56
      %s38 = sphi 0, %s52
      %s39 = sphi 0, %s48
      %s40 = sphi 0, %s37
      %s41 = sphi 0, %s38
      %s42 = sphi 0, %s39
      %s43 = sphi 0, %s40
      %s44 = sphi 0, %s41
      %s45 = sphi 0, %s42
      %s63 = sphi 0, %s65
      %s66 = sphi 0, %s63
      %s67 = sphi 0, %s66
      %s83 = sphi 0, %s67
      %s95 = sphi 0, %s97
      %s98 = sphi 0, %s95
      %s99 = sphi 0, %s98
      %s115 = sphi 0, %s99
      %s125 = sphi 0, %s127
      %s128 = sphi 0, %s125
      %s129 = sphi 0, %s128
      %s145 = sphi 0, %s129
      %s157 = sphi 0, %s159
      %s160 = sphi 0, %s157
      %s161 = sphi 0, %s160
      %s177 = sphi 0, %s161
      %s183 = sphi 0, %s185
      %s186 = sphi 0, %s183
      %s187 = sphi 0, %s186
      %s203 = sphi 0, %s187
      %s209 = sphi 0, %s211
      %s212 = sphi 0, %s209
      %s213 = sphi 0, %s212
      %s229 = sphi 0, %s213
      %s235 = sphi 0, %s237
      %s238 = sphi 0, %s235
      %s239 = sphi 0, %s238
      %s255 = sphi 0, %s239
      %s265 = sphi 0, %s267
      %s268 = sphi 0, %s265
      %s269 = sphi 0, %s268
      %s285 = sphi 0, %s269
      %s295 = sphi 0, %s297
      %s298 = sphi 0, %s295
      %s299 = sphi 0, %s298
      %s315 = sphi 0, %s299
    $region4: #{tpu_custom_call.1} parent=1 // loop_header_branch
      %33 = sbr.rel (%p31) target = $region8
    $region5: #{tpu_custom_call.1} parent=1 // loop_body
      %s35 = ssub.s32 %s30, 1
      %s36 = ssub.s32 %s30, 2
      %s46 = sadd.s32 1, %s39
      %p47 = scmp.ge.s32.totalorder %s46, 1
      %s48 = scalar_select %p47, 0, %s46
      %s49 = sadd.s32 1, %s38
      %s50 = scalar_select %p47, %s49, %s38
      %p51 = scmp.ge.s32.totalorder %s50, 2
      %s52 = scalar_select %p51, 0, %s50
      %s53 = sadd.s32 1, %s37
      %s54 = scalar_select %p51, %s53, %s37
      %p55 = scmp.ge.s32.totalorder %s54, 1
      %s56 = scalar_select %p55, 0, %s54
      %s57 = ssub.s32 %s38, %s52
      %s58 = ssub.s32 %s37, %s56
      %s59 = sor.u32 %s57, %s58
      %s60 = ssub.s32 %s39, %s48
      %s61 = sor.u32 %s59, %s60
      %p62 = scmp.eq.s32.totalorder %s61, 0
      %s64 = sadd.s32 %s63, 1
      %s65 = scalar_select %p62, %s63, %s64
      %p68 = pneg %p62
      %p69 = scmp.eq.s32.totalorder %s30, 1
      %p70 = por %p68, %p69
      %p71 = scmp.ne.s32.totalorder %s63, %s66
      %p72 = scmp.eq.s32.totalorder %s30, 0
      %p73 = por %p71, %p72
      %p74 = scmp.ne.s32.totalorder %s63, %s66
      %p75 = scmp.eq.s32.totalorder %s35, 1
      %p76 = por %p74, %p75
      %p77 = scmp.ne.s32.totalorder %s66, %s67
      %p78 = scmp.eq.s32.totalorder %s35, 0
      %p79 = por %p77, %p78
      %p80 = scmp.ne.s32.totalorder %s66, %s67
      %p81 = scmp.eq.s32.totalorder %s36, 1
      %p82 = por %p80, %p81
      %p84 = scmp.ne.s32.totalorder %s67, %s83
      %p85 = scmp.eq.s32.totalorder %s36, 0
      %p86 = por %p84, %p85
      %s87 = sadd.s32 %s39, 1
      %s88 = sadd.s32 %s48, 1
      %s89 = ssub.s32 %s38, %s52
      %s90 = ssub.s32 %s37, %s56
      %s91 = sor.u32 %s89, %s90
      %s92 = ssub.s32 %s87, %s88
      %s93 = sor.u32 %s91, %s92
      %p94 = scmp.eq.s32.totalorder %s93, 0
      %s96 = sadd.s32 %s95, 1
      %s97 = scalar_select %p94, %s95, %s96
      %p100 = pneg %p94
      %p101 = scmp.eq.s32.totalorder %s30, 1
      %p102 = por %p100, %p101
      %p103 = scmp.ne.s32.totalorder %s95, %s98
      %p104 = scmp.eq.s32.totalorder %s30, 0
      %p105 = por %p103, %p104
      %p106 = scmp.ne.s32.totalorder %s95, %s98
      %p107 = scmp.eq.s32.totalorder %s35, 1
      %p108 = por %p106, %p107
      %p109 = scmp.ne.s32.totalorder %s98, %s99
      %p110 = scmp.eq.s32.totalorder %s35, 0
      %p111 = por %p109, %p110
      %p112 = scmp.ne.s32.totalorder %s98, %s99
      %p113 = scmp.eq.s32.totalorder %s36, 1
      %p114 = por %p112, %p113
      %p116 = scmp.ne.s32.totalorder %s99, %s115
      %p117 = scmp.eq.s32.totalorder %s36, 0
      %p118 = por %p116, %p117
      %s119 = ssub.s32 %s38, %s52
      %s120 = ssub.s32 %s37, %s56
      %s121 = sor.u32 %s119, %s120
      %s122 = ssub.s32 %s39, %s48
      %s123 = sor.u32 %s121, %s122
      %p124 = scmp.eq.s32.totalorder %s123, 0
      %s126 = sadd.s32 %s125, 1
      %s127 = scalar_select %p124, %s125, %s126
      %p130 = pneg %p124
      %p131 = scmp.eq.s32.totalorder %s30, 1
      %p132 = por %p130, %p131
      %p133 = scmp.ne.s32.totalorder %s125, %s128
      %p134 = scmp.eq.s32.totalorder %s30, 0
      %p135 = por %p133, %p134
      %p136 = scmp.ne.s32.totalorder %s125, %s128
      %p137 = scmp.eq.s32.totalorder %s35, 1
      %p138 = por %p136, %p137
      %p139 = scmp.ne.s32.totalorder %s128, %s129
      %p140 = scmp.eq.s32.totalorder %s35, 0
      %p141 = por %p139, %p140
      %p142 = scmp.ne.s32.totalorder %s128, %s129
      %p143 = scmp.eq.s32.totalorder %s36, 1
      %p144 = por %p142, %p143
      %p146 = scmp.ne.s32.totalorder %s129, %s145
      %p147 = scmp.eq.s32.totalorder %s36, 0
      %p148 = por %p146, %p147
      %s149 = sadd.s32 %s39, 1
      %s150 = sadd.s32 %s48, 1
      %s151 = ssub.s32 %s38, %s52
      %s152 = ssub.s32 %s37, %s56
      %s153 = sor.u32 %s151, %s152
      %s154 = ssub.s32 %s149, %s150
      %s155 = sor.u32 %s153, %s154
      %p156 = scmp.eq.s32.totalorder %s155, 0
      %s158 = sadd.s32 %s157, 1
      %s159 = scalar_select %p156, %s157, %s158
      %p162 = pneg %p156
      %p163 = scmp.eq.s32.totalorder %s30, 1
      %p164 = por %p162, %p163
      %p165 = scmp.ne.s32.totalorder %s157, %s160
      %p166 = scmp.eq.s32.totalorder %s30, 0
      %p167 = por %p165, %p166
      %p168 = scmp.ne.s32.totalorder %s157, %s160
      %p169 = scmp.eq.s32.totalorder %s35, 1
      %p170 = por %p168, %p169
      %p171 = scmp.ne.s32.totalorder %s160, %s161
      %p172 = scmp.eq.s32.totalorder %s35, 0
      %p173 = por %p171, %p172
      %p174 = scmp.ne.s32.totalorder %s160, %s161
      %p175 = scmp.eq.s32.totalorder %s36, 1
      %p176 = por %p174, %p175
      %p178 = scmp.ne.s32.totalorder %s161, %s177
      %p179 = scmp.eq.s32.totalorder %s36, 0
      %p180 = por %p178, %p179
      %s181 = ssub.s32 %s37, %s56
      %p182 = scmp.eq.s32.totalorder %s181, 0
      %s184 = sadd.s32 %s183, 1
      %s185 = scalar_select %p182, %s183, %s184
      %p188 = pneg %p182
      %p189 = scmp.eq.s32.totalorder %s30, 1
      %p190 = por %p188, %p189
      %p191 = scmp.ne.s32.totalorder %s183, %s186
      %p192 = scmp.eq.s32.totalorder %s30, 0
      %p193 = por %p191, %p192
      %p194 = scmp.ne.s32.totalorder %s183, %s186
      %p195 = scmp.eq.s32.totalorder %s35, 1
      %p196 = por %p194, %p195
      %p197 = scmp.ne.s32.totalorder %s186, %s187
      %p198 = scmp.eq.s32.totalorder %s35, 0
      %p199 = por %p197, %p198
      %p200 = scmp.ne.s32.totalorder %s186, %s187
      %p201 = scmp.eq.s32.totalorder %s36, 1
      %p202 = por %p200, %p201
      %p204 = scmp.ne.s32.totalorder %s187, %s203
      %p205 = scmp.eq.s32.totalorder %s36, 0
      %p206 = por %p204, %p205
      %s207 = ssub.s32 %s37, %s56
      %p208 = scmp.eq.s32.totalorder %s207, 0
      %s210 = sadd.s32 %s209, 1
      %s211 = scalar_select %p208, %s209, %s210
      %p214 = pneg %p208
      %p215 = scmp.eq.s32.totalorder %s30, 1
      %p216 = por %p214, %p215
      %p217 = scmp.ne.s32.totalorder %s209, %s212
      %p218 = scmp.eq.s32.totalorder %s30, 0
      %p219 = por %p217, %p218
      %p220 = scmp.ne.s32.totalorder %s209, %s212
      %p221 = scmp.eq.s32.totalorder %s35, 1
      %p222 = por %p220, %p221
      %p223 = scmp.ne.s32.totalorder %s212, %s213
      %p224 = scmp.eq.s32.totalorder %s35, 0
      %p225 = por %p223, %p224
      %p226 = scmp.ne.s32.totalorder %s212, %s213
      %p227 = scmp.eq.s32.totalorder %s36, 1
      %p228 = por %p226, %p227
      %p230 = scmp.ne.s32.totalorder %s213, %s229
      %p231 = scmp.eq.s32.totalorder %s36, 0
      %p232 = por %p230, %p231
      %s233 = ssub.s32 %s37, %s56
      %p234 = scmp.eq.s32.totalorder %s233, 0
      %s236 = sadd.s32 %s235, 1
      %s237 = scalar_select %p234, %s235, %s236
      %p240 = pneg %p234
      %p241 = scmp.eq.s32.totalorder %s30, 1
      %p242 = por %p240, %p241
      %p243 = scmp.ne.s32.totalorder %s235, %s238
      %p244 = scmp.eq.s32.totalorder %s30, 0
      %p245 = por %p243, %p244
      %p246 = scmp.ne.s32.totalorder %s235, %s238
      %p247 = scmp.eq.s32.totalorder %s35, 1
      %p248 = por %p246, %p247
      %p249 = scmp.ne.s32.totalorder %s238, %s239
      %p250 = scmp.eq.s32.totalorder %s35, 0
      %p251 = por %p249, %p250
      %p252 = scmp.ne.s32.totalorder %s238, %s239
      %p253 = scmp.eq.s32.totalorder %s36, 1
      %p254 = por %p252, %p253
      %p256 = scmp.ne.s32.totalorder %s239, %s255
      %p257 = scmp.eq.s32.totalorder %s36, 0
      %p258 = por %p256, %p257
      %s259 = ssub.s32 %s38, %s52
      %s260 = ssub.s32 %s37, %s56
      %s261 = sor.u32 %s259, %s260
      %s262 = ssub.s32 %s39, %s48
      %s263 = sor.u32 %s261, %s262
      %p264 = scmp.eq.s32.totalorder %s263, 0
      %s266 = sadd.s32 %s265, 1
      %s267 = scalar_select %p264, %s265, %s266
      %p270 = pneg %p264
      %p271 = scmp.eq.s32.totalorder %s30, 1
      %p272 = por %p270, %p271
      %p273 = scmp.ne.s32.totalorder %s265, %s268
      %p274 = scmp.eq.s32.totalorder %s30, 0
      %p275 = por %p273, %p274
      %p276 = scmp.ne.s32.totalorder %s265, %s268
      %p277 = scmp.eq.s32.totalorder %s35, 1
      %p278 = por %p276, %p277
      %p279 = scmp.ne.s32.totalorder %s268, %s269
      %p280 = scmp.eq.s32.totalorder %s35, 0
      %p281 = por %p279, %p280
      %p282 = scmp.ne.s32.totalorder %s268, %s269
      %p283 = scmp.eq.s32.totalorder %s36, 1
      %p284 = por %p282, %p283
      %p286 = scmp.ne.s32.totalorder %s269, %s285
      %p287 = scmp.eq.s32.totalorder %s36, 0
      %p288 = por %p286, %p287
      %s289 = ssub.s32 %s38, %s52
      %s290 = ssub.s32 %s37, %s56
      %s291 = sor.u32 %s289, %s290
      %s292 = ssub.s32 %s39, %s48
      %s293 = sor.u32 %s291, %s292
      %p294 = scmp.eq.s32.totalorder %s293, 0
      %s296 = sadd.s32 %s295, 1
      %s297 = scalar_select %p294, %s295, %s296
      %p300 = pneg %p294
      %p301 = scmp.eq.s32.totalorder %s30, 1
      %p302 = por %p300, %p301
      %p303 = scmp.ne.s32.totalorder %s295, %s298
      %p304 = scmp.eq.s32.totalorder %s30, 0
      %p305 = por %p303, %p304
      %p306 = scmp.ne.s32.totalorder %s295, %s298
      %p307 = scmp.eq.s32.totalorder %s35, 1
      %p308 = por %p306, %p307
      %p309 = scmp.ne.s32.totalorder %s298, %s299
      %p310 = scmp.eq.s32.totalorder %s35, 0
      %p311 = por %p309, %p310
      %p312 = scmp.ne.s32.totalorder %s298, %s299
      %p313 = scmp.eq.s32.totalorder %s36, 1
      %p314 = por %p312, %p313
      %p316 = scmp.ne.s32.totalorder %s299, %s315
      %p317 = scmp.eq.s32.totalorder %s36, 0
      %p318 = por %p316, %p317
      %p319 = scmp.le.s32.totalorder 1, %s30
      %p320 = scmp.lt.s32.totalorder %s30, 3
      %p321 = pnand %p319, %p320
      %p322 = pneg %p321
      // Predicated region
      $region9: #{tpu_custom_call.1} parent=5 // pred_check
        _
      $region10: #{tpu_custom_call.1} parent=5 // pred_check_branch
        %324 = sbr.rel (%p321) target = $region12
      $region11: #{tpu_custom_call.1} parent=5 // pred_region
        %s325 = ssub.s32 %s30, 1
        // Predicated region
        $region13: #{tpu_custom_call.1} parent=11 // pred_check
          %p326 = pneg %p199
        $region14: #{tpu_custom_call.1} parent=11 // pred_check_branch
          %328 = sbr.rel (%p326) target = $region16
        $region15: #{tpu_custom_call.1} parent=11 // pred_region
          %p329 = scmp.lt.s32.totalorder %s40, 0
          %s330 = scalar_select %p329, %s40, 0
          %s331 = smul.addr %s330, 3
          %s332 = smul.addr %s331, 4
          %s333 = scalar_lea.vmem %s4, %s332
        $region16: #{tpu_custom_call.1} parent=11 // pred_fallthru
          _
        // Predicated region
        $region17: #{tpu_custom_call.1} parent=11 // pred_check
          %p334 = pneg %p225
        $region18: #{tpu_custom_call.1} parent=11 // pred_check_branch
          %336 = sbr.rel (%p334) target = $region20
        $region19: #{tpu_custom_call.1} parent=11 // pred_region
          %338 = vsyncadd [#allocation9], 0
          %s339 = smul.addr %s40, 3
          %s340 = smul.addr %s339, 4
          %s341 = scalar_lea.hbm %s5, %s340
          %s342 = sshll.u32 %s341, 4
          %s343 = int_to_ptr.hbm [resolvable:$true] %s342
          %s344 = sshll.u32 [#allocation10], 4
          %s345 = int_to_ptr.vmem [resolvable:$true] %s344
          %350 = dma.hbm_to_vmem [thread:$0]  %s343, 192, %s345, [#allocation9], 64, 64, 4
        $region20: #{tpu_custom_call.1} parent=11 // pred_fallthru
          _
        // Predicated region
        $region21: #{tpu_custom_call.1} parent=11 // pred_check
          %p351 = pneg %p251
        $region22: #{tpu_custom_call.1} parent=11 // pred_check_branch
          %353 = sbr.rel (%p351) target = $region24
        $region23: #{tpu_custom_call.1} parent=11 // pred_region
          %p354 = scmp.lt.s32.totalorder %s40, 0
          %s355 = scalar_select %p354, %s40, 0
          %s356 = smul.addr %s355, 2
          %s357 = smul.addr %s356, 8
          %s358 = scalar_lea.vmem %s6, %s357
        $region24: #{tpu_custom_call.1} parent=11 // pred_fallthru
          _
      $region12: #{tpu_custom_call.1} parent=5 // pred_fallthru
        _
      %p359 = scmp.lt.s32.totalorder %s30, 2
      // Predicated region
      $region25: #{tpu_custom_call.1} parent=5 // pred_check
        %p360 = pneg %p359
      $region26: #{tpu_custom_call.1} parent=5 // pred_check_branch
        %362 = sbr.rel (%p360) target = $region28
      $region27: #{tpu_custom_call.1} parent=5 // pred_region
        // Predicated region
        $region29: #{tpu_custom_call.1} parent=27 // pred_check
          %p363 = pneg %p73
        $region30: #{tpu_custom_call.1} parent=27 // pred_check_branch
          %365 = sbr.rel (%p363) target = $region32
        $region31: #{tpu_custom_call.1} parent=27 // pred_region
          %s366 = sand.u32 %s63, 1
          %s367 = scalar_lea.sflag [#allocation3], %s366
          %s368 = sand.u32 %s63, 1
          %s369 = smul.addr %s368, 8
          %s370 = scalar_lea.vmem [#allocation2], %s369
          %372 = vsyncadd %s367, 0
          %s373 = smul.addr %s37, 4
          %s374 = sadd.s32 %s39, %s373
          %s375 = smul.addr %s38, 4
          %s376 = sadd.s32 %s374, %s375
          %s377 = smul.addr %s376, 4
          %s378 = scalar_lea.hbm %s0, %s377
          %s379 = sshll.u32 %s378, 4
          %s380 = int_to_ptr.hbm [resolvable:$true] %s379
          %s381 = sshll.u32 %s370, 4
          %s382 = int_to_ptr.vmem [resolvable:$true] %s381
          %387 = dma.hbm_to_vmem [thread:$0]  %s380, 128, %s382, %s367, 128, 64, 4
        $region32: #{tpu_custom_call.1} parent=27 // pred_fallthru
          _
        // Predicated region
        $region33: #{tpu_custom_call.1} parent=27 // pred_check
          %p388 = pneg %p105
        $region34: #{tpu_custom_call.1} parent=27 // pred_check_branch
          %390 = sbr.rel (%p388) target = $region36
        $region35: #{tpu_custom_call.1} parent=27 // pred_region
          %s391 = sand.u32 %s30, 1
          %s392 = scalar_lea.sflag [#allocation6], %s391
          %s393 = sand.u32 %s95, 1
          %s394 = smul.addr %s393, 8
          %s395 = scalar_lea.vmem [#allocation5], %s394
          %s396 = sadd.s32 %s39, 1
          %398 = vsyncadd %s392, 0
          %s399 = smul.addr %s37, 4
          %s400 = sadd.s32 %s396, %s399
          %s401 = smul.addr %s38, 4
          %s402 = sadd.s32 %s400, %s401
          %s403 = smul.addr %s402, 4
          %s404 = scalar_lea.hbm %s1, %s403
          %s405 = sshll.u32 %s404, 4
          %s406 = int_to_ptr.hbm [resolvable:$true] %s405
          %s407 = sshll.u32 %s395, 4
          %s408 = int_to_ptr.vmem [resolvable:$true] %s407
          %413 = dma.hbm_to_vmem [thread:$0]  %s406, 128, %s408, %s392, 128, 64, 4
        $region36: #{tpu_custom_call.1} parent=27 // pred_fallthru
          _
        // Predicated region
        $region37: #{tpu_custom_call.1} parent=27 // pred_check
          %p414 = pneg %p135
        $region38: #{tpu_custom_call.1} parent=27 // pred_check_branch
          %416 = sbr.rel (%p414) target = $region40
        $region39: #{tpu_custom_call.1} parent=27 // pred_region
          %s417 = sand.u32 %s30, 1
          %s418 = scalar_lea.sflag [#allocation6], %s417
          %s419 = sand.u32 %s125, 1
          %s420 = smul.addr %s419, 8
          %s421 = scalar_lea.vmem [#allocation7], %s420
          %423 = vsyncadd %s418, 0
          %s424 = smul.addr %s37, 4
          %s425 = sadd.s32 %s39, %s424
          %s426 = smul.addr %s38, 4
          %s427 = sadd.s32 %s425, %s426
          %s428 = smul.addr %s427, 4
          %s429 = scalar_lea.hbm %s2, %s428
          %s430 = sshll.u32 %s429, 4
          %s431 = int_to_ptr.hbm [resolvable:$true] %s430
          %s432 = sshll.u32 %s421, 4
          %s433 = int_to_ptr.vmem [resolvable:$true] %s432
          %438 = dma.hbm_to_vmem [thread:$0]  %s431, 128, %s433, %s418, 128, 64, 4
        $region40: #{tpu_custom_call.1} parent=27 // pred_fallthru
          _
        // Predicated region
        $region41: #{tpu_custom_call.1} parent=27 // pred_check
          %p439 = pneg %p167
        $region42: #{tpu_custom_call.1} parent=27 // pred_check_branch
          %441 = sbr.rel (%p439) target = $region44
        $region43: #{tpu_custom_call.1} parent=27 // pred_region
          %s442 = sand.u32 %s30, 1
          %s443 = scalar_lea.sflag [#allocation9], %s442
          %s444 = sand.u32 %s157, 1
          %s445 = smul.addr %s444, 8
          %s446 = scalar_lea.vmem [#allocation8], %s445
          %s447 = sadd.s32 %s39, 1
          %449 = vsyncadd %s443, 0
          %s450 = smul.addr %s37, 4
          %s451 = sadd.s32 %s447, %s450
          %s452 = smul.addr %s38, 4
          %s453 = sadd.s32 %s451, %s452
          %s454 = smul.addr %s453, 4
          %s455 = scalar_lea.hbm %s3, %s454
          %s456 = sshll.u32 %s455, 4
          %s457 = int_to_ptr.hbm [resolvable:$true] %s456
          %s458 = sshll.u32 %s446, 4
          %s459 = int_to_ptr.vmem [resolvable:$true] %s458
          %464 = dma.hbm_to_vmem [thread:$0]  %s457, 128, %s459, %s443, 128, 64, 4
        $region44: #{tpu_custom_call.1} parent=27 // pred_fallthru
          _
      $region28: #{tpu_custom_call.1} parent=5 // pred_fallthru
        _
      %p465 = scmp.le.s32.totalorder 1, %s30
      %p466 = scmp.lt.s32.totalorder %s30, 3
      %p467 = pnand %p465, %p466
      %p468 = pneg %p467
      // Predicated region
      $region45: #{tpu_custom_call.1} parent=5 // pred_check
        _
      $region46: #{tpu_custom_call.1} parent=5 // pred_check_branch
        %470 = sbr.rel (%p467) target = $region48
      $region47: #{tpu_custom_call.1} parent=5 // pred_region
        %s471 = ssub.s32 %s30, 1
        %s472 = sand.u32 %s66, 1
        %s473 = scalar_lea.sflag [#allocation3], %s472
        %s474 = sand.u32 %s66, 1
        %s475 = smul.addr %s474, 8
        %s476 = scalar_lea.vmem [#allocation2], %s475
        // Predicated region
        $region49: #{tpu_custom_call.1} parent=47 // pred_check
          %p477 = pneg %p79
        $region50: #{tpu_custom_call.1} parent=47 // pred_check_branch
          %479 = sbr.rel (%p477) target = $region52
        $region51: #{tpu_custom_call.1} parent=47 // pred_region
          %481 = dma.done %s473, 128
        $region52: #{tpu_custom_call.1} parent=47 // pred_fallthru
          _
        %s482 = sand.u32 %s35, 1
        %s483 = scalar_lea.sflag [#allocation6], %s482
        %s484 = sand.u32 %s98, 1
        %s485 = smul.addr %s484, 8
        %s486 = scalar_lea.vmem [#allocation5], %s485
        // Predicated region
        $region53: #{tpu_custom_call.1} parent=47 // pred_check
          %p487 = pneg %p111
        $region54: #{tpu_custom_call.1} parent=47 // pred_check_branch
          %489 = sbr.rel (%p487) target = $region56
        $region55: #{tpu_custom_call.1} parent=47 // pred_region
          %491 = dma.done %s483, 128
        $region56: #{tpu_custom_call.1} parent=47 // pred_fallthru
          _
        %s492 = sand.u32 %s35, 1
        %s493 = scalar_lea.sflag [#allocation6], %s492
        %s494 = sand.u32 %s128, 1
        %s495 = smul.addr %s494, 8
        %s496 = scalar_lea.vmem [#allocation7], %s495
        // Predicated region
        $region57: #{tpu_custom_call.1} parent=47 // pred_check
          %p497 = pneg %p141
        $region58: #{tpu_custom_call.1} parent=47 // pred_check_branch
          %499 = sbr.rel (%p497) target = $region60
        $region59: #{tpu_custom_call.1} parent=47 // pred_region
          %501 = dma.done %s493, 128
        $region60: #{tpu_custom_call.1} parent=47 // pred_fallthru
          _
        %s502 = sand.u32 %s35, 1
        %s503 = scalar_lea.sflag [#allocation9], %s502
        %s504 = sand.u32 %s160, 1
        %s505 = smul.addr %s504, 8
        %s506 = scalar_lea.vmem [#allocation8], %s505
        // Predicated region
        $region61: #{tpu_custom_call.1} parent=47 // pred_check
          %p507 = pneg %p173
        $region62: #{tpu_custom_call.1} parent=47 // pred_check_branch
          %509 = sbr.rel (%p507) target = $region64
        $region63: #{tpu_custom_call.1} parent=47 // pred_region
          %511 = dma.done %s503, 128
        $region64: #{tpu_custom_call.1} parent=47 // pred_fallthru
          _
        // Predicated region
        $region65: #{tpu_custom_call.1} parent=47 // pred_check
          %p512 = pneg %p225
        $region66: #{tpu_custom_call.1} parent=47 // pred_check_branch
          %514 = sbr.rel (%p512) target = $region68
        $region67: #{tpu_custom_call.1} parent=47 // pred_region
          %516 = dma.done [#allocation9], 192
        $region68: #{tpu_custom_call.1} parent=47 // pred_fallthru
          _
        %s517 = sand.u32 %s66, 1
        %s518 = scalar_lea.sflag [#allocation3], %s517
        %s519 = sand.u32 %s66, 1
        %s520 = smul.addr %s519, 8
        %s521 = scalar_lea.vmem [#allocation2], %s520
        %p522 = pneg %p79
        %p523 = pneg %p76
        %s524 = sand.u32 %s35, 1
        %s525 = scalar_lea.sflag [#allocation6], %s524
        %s526 = sand.u32 %s98, 1
        %s527 = smul.addr %s526, 8
        %s528 = scalar_lea.vmem [#allocation5], %s527
        %p529 = pneg %p111
        %p530 = pneg %p108
        %s531 = sand.u32 %s35, 1
        %s532 = scalar_lea.sflag [#allocation6], %s531
        %s533 = sand.u32 %s128, 1
        %s534 = smul.addr %s533, 8
        %s535 = scalar_lea.vmem [#allocation7], %s534
        %p536 = pneg %p141
        %p537 = pneg %p138
        %s538 = sand.u32 %s35, 1
        %s539 = scalar_lea.sflag [#allocation9], %s538
        %s540 = sand.u32 %s160, 1
        %s541 = smul.addr %s540, 8
        %s542 = scalar_lea.vmem [#allocation8], %s541
        %p543 = pneg %p173
        %p544 = pneg %p170
        %p545 = scmp.lt.s32.totalorder %s40, 0
        %s546 = scalar_select %p545, %s40, 0
        %s547 = smul.addr %s546, 3
        %s548 = smul.addr %s547, 4
        %s549 = scalar_lea.vmem %s4, %s548
        %p550 = pneg %p199
        %p551 = pneg %p196
        %p552 = pneg %p225
        %p553 = pneg %p222
        %p554 = scmp.lt.s32.totalorder %s40, 0
        %s555 = scalar_select %p554, %s40, 0
        %s556 = smul.addr %s555, 2
        %s557 = smul.addr %s556, 8
        %s558 = scalar_lea.vmem %s6, %s557
        %p559 = pneg %p251
        %p560 = pneg %p248
        %p561 = pneg %p281
        %p562 = pneg %p278
        %s563 = sand.u32 %s268, 1
        %s564 = scalar_lea.sflag [#allocation4], %s563
        %s565 = sand.u32 %s268, 1
        %s566 = smul.addr %s565, 8
        %s567 = scalar_lea.vmem [#allocation11], %s566
        %p568 = pneg %p311
        %p569 = pneg %p308
        %s570 = sand.u32 %s298, 1
        %s571 = scalar_lea.sflag [#allocation13], %s570
        %s572 = sand.u32 %s298, 1
        %s573 = smul.addr %s572, 8
        %s574 = scalar_lea.vmem [#allocation12], %s573
        %s575 = sadd.s32 %s42, 1
        %s576 = sadd.s32 %s42, 1
        %p577 = scmp.lt.s32.totalorder %s40, 0
        %s578 = scalar_select %p577, %s40, 0
        %s579 = smul.addr %s578, 3
        %s580 = smul.addr %s579, 4
        %s581 = scalar_lea.vmem %s4, %s580
        %p582 = scmp.lt.s32.totalorder %s40, 0
        %s583 = scalar_select %p582, %s40, 0
        %s584 = smul.addr %s583, 2
        %s585 = smul.addr %s584, 8
        %s586 = scalar_lea.vmem %s6, %s585
        %v588 = vld [vmem:[%s586] sm:$0xff]
        %590 = vset.pattern.permute.xlu0 0
        %591 = vperm.xlu0 %590, %v588
        %v592 = vpop.permute.xlu0 %591
        %594 = vst [vmem:[%s567] sm:$0xff] %v592
        %s595 = scalar_lea.vmem %s586, 8
        %v596 = vld [vmem:[%s595] sm:$0xff]
        %598 = vset.pattern.permute.xlu0 0
        %599 = vperm.xlu0 %598, %v596
        %v600 = vpop.permute.xlu0 %599
        %602 = vst [vmem:[%s574] sm:$0xff] %v600
        %v603 = vld [vmem:[%s476] sm:$0xf]
        %v604 = vld [vmem:[%s476 + $0x4] sm:$0xf]
        %v605 = vld [vmem:[%s486] sm:$0xf]
        %v606 = vld [vmem:[%s486 + $0x4] sm:$0xf]
        %v609 = vunpack.c.l.b16 %v603
        %v610 = vunpack.c.l.b16 %v604
        %v611 = vpack.c.b16 %v610, %v609
        %v615 = vunpack.c.l.b16 %v605
        %v616 = vunpack.c.l.b16 %v606
        %v617 = vpack.c.b16 %v616, %v615
        %v618 = vld [vmem:[%s496] sm:$0xf]
        %v619 = vld [vmem:[%s496 + $0x4] sm:$0xf]
        %v620 = vld [vmem:[%s506] sm:$0xf]
        %v621 = vld [vmem:[%s506 + $0x4] sm:$0xf]
        %v624 = vunpack.c.l.b16 %v618
        %v625 = vunpack.c.l.b16 %v619
        %v626 = vpack.c.b16 %v625, %v624
        %v630 = vunpack.c.l.b16 %v620
        %v631 = vunpack.c.l.b16 %v621
        %v632 = vpack.c.b16 %v631, %v630
        %v633 = vld [vmem:[%s581] sm:$0xf]
        %v634 = vld [vmem:[#allocation10] sm:$0xf]
        %v635 = vld [vmem:[%s567] sm:$0xff]
        %vm636 = vcmask 130048
        %v638 = vsel %vm636, %v633, 0
        %640 = vmatpush.bf16.msra.mxu0 0
        %641 = vmatpush.bf16.msra.mxu0 0
        %642 = vmatpush.bf16.msra.mxu0 0
        %643 = vmatpush.bf16.msra.mxu0 0
        %644 = vmatpush.bf16.msra.mxu0 0
        %645 = vmatpush.bf16.msra.mxu0 0
        %646 = vmatpush.bf16.msra.mxu0 0
        %647 = vmatpush.bf16.msra.mxu0 %v611
        %648 = vmatmul.bf16.gmra.mxu0 %v638
        %v649 = vpop.f32.mrf.mxu0
        %v650 = vadd.f32 0.0, %v649
        %v651 = vpop.f32.mrf.mxu0
        %652 = vdwg.mxu0
        %v654 = vsel %vm636, %v634, 0
        %656 = vmatpush.bf16.msra.mxu0 0
        %657 = vmatpush.bf16.msra.mxu0 0
        %658 = vmatpush.bf16.msra.mxu0 0
        %659 = vmatpush.bf16.msra.mxu0 0
        %660 = vmatpush.bf16.msra.mxu0 0
        %661 = vmatpush.bf16.msra.mxu0 0
        %662 = vmatpush.bf16.msra.mxu0 0
        %663 = vmatpush.bf16.msra.mxu0 %v626
        %664 = vmatmul.bf16.gmra.mxu0 %v654
        %v665 = vpop.f32.mrf.mxu0
        %v666 = vadd.f32 0.0, %v665
        %v667 = vpop.f32.mrf.mxu0
        %668 = vdwg.mxu0
        %v669 = vsub.f32 %v650, %v666
        %v670 = vadd.f32 %v635, %v669
        %671 = vst [vmem:[%s567] sm:$0xff] %v670
        %v672 = vld [vmem:[%s574] sm:$0xff]
        %673 = vmatpush.bf16.msra.mxu0 0
        %674 = vmatpush.bf16.msra.mxu0 0
        %675 = vmatpush.bf16.msra.mxu0 0
        %676 = vmatpush.bf16.msra.mxu0 0
        %677 = vmatpush.bf16.msra.mxu0 0
        %678 = vmatpush.bf16.msra.mxu0 0
        %679 = vmatpush.bf16.msra.mxu0 0
        %680 = vmatpush.bf16.msra.mxu0 %v626
        %681 = vmatmul.bf16.gmra.mxu0 %v638
        %v682 = vpop.f32.mrf.mxu0
        %v683 = vadd.f32 0.0, %v682
        %v684 = vpop.f32.mrf.mxu0
        %685 = vdwg.mxu0
        %686 = vmatpush.bf16.msra.mxu0 0
        %687 = vmatpush.bf16.msra.mxu0 0
        %688 = vmatpush.bf16.msra.mxu0 0
        %689 = vmatpush.bf16.msra.mxu0 0
        %690 = vmatpush.bf16.msra.mxu0 0
        %691 = vmatpush.bf16.msra.mxu0 0
        %692 = vmatpush.bf16.msra.mxu0 0
        %693 = vmatpush.bf16.msra.mxu0 %v611
        %694 = vmatmul.bf16.gmra.mxu0 %v654
        %v695 = vpop.f32.mrf.mxu0
        %v696 = vadd.f32 %v683, %v695
        %v697 = vpop.f32.mrf.mxu0
        %698 = vdwg.mxu0
        %v699 = vadd.f32 %v672, %v696
        %700 = vst [vmem:[%s574] sm:$0xff] %v699
        %s701 = scalar_lea.vmem %s581, 4
        %v702 = vld [vmem:[%s701] sm:$0xf]
        %s703 = scalar_lea.vmem [#allocation10], 4
        %v704 = vld [vmem:[%s703] sm:$0xf]
        %v705 = vld [vmem:[%s567] sm:$0xff]
        %706 = vrot.lane.b32.xlu0 %v611, 127
        %v707 = vpop.permute.xlu0 %706
        %708 = vrot.lane.b32.xlu0 %v617, 127
        %v709 = vpop.permute.xlu0 %708
        %vm710 = vcmask 1039360
        %v711 = vsel %vm710, %v707, %v709
        %v714 = vsel %vm636, %v702, 0
        %716 = vmatpush.bf16.msra.mxu0 0
        %717 = vmatpush.bf16.msra.mxu0 0
        %718 = vmatpush.bf16.msra.mxu0 0
        %719 = vmatpush.bf16.msra.mxu0 0
        %720 = vmatpush.bf16.msra.mxu0 0
        %721 = vmatpush.bf16.msra.mxu0 0
        %722 = vmatpush.bf16.msra.mxu0 0
        %723 = vmatpush.bf16.msra.mxu0 %v711
        %724 = vmatmul.bf16.gmra.mxu0 %v714
        %v725 = vpop.f32.mrf.mxu0
        %v726 = vadd.f32 0.0, %v725
        %v727 = vpop.f32.mrf.mxu0
        %728 = vdwg.mxu0
        %729 = vrot.lane.b32.xlu0 %v626, 127
        %v730 = vpop.permute.xlu0 %729
        %731 = vrot.lane.b32.xlu0 %v632, 127
        %v732 = vpop.permute.xlu0 %731
        %v733 = vsel %vm710, %v730, %v732
        %v736 = vsel %vm636, %v704, 0
        %738 = vmatpush.bf16.msra.mxu0 0
        %739 = vmatpush.bf16.msra.mxu0 0
        %740 = vmatpush.bf16.msra.mxu0 0
        %741 = vmatpush.bf16.msra.mxu0 0
        %742 = vmatpush.bf16.msra.mxu0 0
        %743 = vmatpush.bf16.msra.mxu0 0
        %744 = vmatpush.bf16.msra.mxu0 0
        %745 = vmatpush.bf16.msra.mxu0 %v733
        %746 = vmatmul.bf16.gmra.mxu0 %v736
        %v747 = vpop.f32.mrf.mxu0
        %v748 = vadd.f32 0.0, %v747
        %v749 = vpop.f32.mrf.mxu0
        %750 = vdwg.mxu0
        %v751 = vsub.f32 %v726, %v748
        %v752 = vadd.f32 %v705, %v751
        %753 = vst [vmem:[%s567] sm:$0xff] %v752
        %v754 = vld [vmem:[%s574] sm:$0xff]
        %755 = vmatpush.bf16.msra.mxu0 0
        %756 = vmatpush.bf16.msra.mxu0 0
        %757 = vmatpush.bf16.msra.mxu0 0
        %758 = vmatpush.bf16.msra.mxu0 0
        %759 = vmatpush.bf16.msra.mxu0 0
        %760 = vmatpush.bf16.msra.mxu0 0
        %761 = vmatpush.bf16.msra.mxu0 0
        %762 = vmatpush.bf16.msra.mxu0 %v733
        %763 = vmatmul.bf16.gmra.mxu0 %v714
        %v764 = vpop.f32.mrf.mxu0
        %v765 = vadd.f32 0.0, %v764
        %v766 = vpop.f32.mrf.mxu0
        %767 = vdwg.mxu0
        %768 = vmatpush.bf16.msra.mxu0 0
        %769 = vmatpush.bf16.msra.mxu0 0
        %770 = vmatpush.bf16.msra.mxu0 0
        %771 = vmatpush.bf16.msra.mxu0 0
        %772 = vmatpush.bf16.msra.mxu0 0
        %773 = vmatpush.bf16.msra.mxu0 0
        %774 = vmatpush.bf16.msra.mxu0 0
        %775 = vmatpush.bf16.msra.mxu0 %v711
        %776 = vmatmul.bf16.gmra.mxu0 %v736
        %v777 = vpop.f32.mrf.mxu0
        %v778 = vadd.f32 %v765, %v777
        %v779 = vpop.f32.mrf.mxu0
        %780 = vdwg.mxu0
        %v781 = vadd.f32 %v754, %v778
        %782 = vst [vmem:[%s574] sm:$0xff] %v781
        %s783 = scalar_lea.vmem %s581, 8
        %v784 = vld [vmem:[%s783] sm:$0xf]
        %s785 = scalar_lea.vmem [#allocation10], 8
        %v786 = vld [vmem:[%s785] sm:$0xf]
        %v787 = vld [vmem:[%s567] sm:$0xff]
        %788 = vrot.lane.b32.xlu0 %v611, 126
        %v789 = vpop.permute.xlu0 %788
        %790 = vrot.lane.b32.xlu0 %v617, 126
        %v791 = vpop.permute.xlu0 %790
        %vm792 = vcmask 1031168
        %v793 = vsel %vm792, %v789, %v791
        %v796 = vsel %vm636, %v784, 0
        %798 = vmatpush.bf16.msra.mxu0 0
        %799 = vmatpush.bf16.msra.mxu0 0
        %800 = vmatpush.bf16.msra.mxu0 0
        %801 = vmatpush.bf16.msra.mxu0 0
        %802 = vmatpush.bf16.msra.mxu0 0
        %803 = vmatpush.bf16.msra.mxu0 0
        %804 = vmatpush.bf16.msra.mxu0 0
        %805 = vmatpush.bf16.msra.mxu0 %v793
        %806 = vmatmul.bf16.gmra.mxu0 %v796
        %v807 = vpop.f32.mrf.mxu0
        %v808 = vadd.f32 0.0, %v807
        %v809 = vpop.f32.mrf.mxu0
        %810 = vdwg.mxu0
        %811 = vrot.lane.b32.xlu0 %v626, 126
        %v812 = vpop.permute.xlu0 %811
        %813 = vrot.lane.b32.xlu0 %v632, 126
        %v814 = vpop.permute.xlu0 %813
        %v815 = vsel %vm792, %v812, %v814
        %v818 = vsel %vm636, %v786, 0
        %820 = vmatpush.bf16.msra.mxu0 0
        %821 = vmatpush.bf16.msra.mxu0 0
        %822 = vmatpush.bf16.msra.mxu0 0
        %823 = vmatpush.bf16.msra.mxu0 0
        %824 = vmatpush.bf16.msra.mxu0 0
        %825 = vmatpush.bf16.msra.mxu0 0
        %826 = vmatpush.bf16.msra.mxu0 0
        %827 = vmatpush.bf16.msra.mxu0 %v815
        %828 = vmatmul.bf16.gmra.mxu0 %v818
        %v829 = vpop.f32.mrf.mxu0
        %v830 = vadd.f32 0.0, %v829
        %v831 = vpop.f32.mrf.mxu0
        %832 = vdwg.mxu0
        %v833 = vsub.f32 %v808, %v830
        %v834 = vadd.f32 %v787, %v833
        %835 = vst [vmem:[%s567] sm:$0xff] %v834
        %v836 = vld [vmem:[%s574] sm:$0xff]
        %837 = vmatpush.bf16.msra.mxu0 0
        %838 = vmatpush.bf16.msra.mxu0 0
        %839 = vmatpush.bf16.msra.mxu0 0
        %840 = vmatpush.bf16.msra.mxu0 0
        %841 = vmatpush.bf16.msra.mxu0 0
        %842 = vmatpush.bf16.msra.mxu0 0
        %843 = vmatpush.bf16.msra.mxu0 0
        %844 = vmatpush.bf16.msra.mxu0 %v815
        %845 = vmatmul.bf16.gmra.mxu0 %v796
        %v846 = vpop.f32.mrf.mxu0
        %v847 = vadd.f32 0.0, %v846
        %v848 = vpop.f32.mrf.mxu0
        %849 = vdwg.mxu0
        %850 = vmatpush.bf16.msra.mxu0 0
        %851 = vmatpush.bf16.msra.mxu0 0
        %852 = vmatpush.bf16.msra.mxu0 0
        %853 = vmatpush.bf16.msra.mxu0 0
        %854 = vmatpush.bf16.msra.mxu0 0
        %855 = vmatpush.bf16.msra.mxu0 0
        %856 = vmatpush.bf16.msra.mxu0 0
        %857 = vmatpush.bf16.msra.mxu0 %v793
        %858 = vmatmul.bf16.gmra.mxu0 %v818
        %v859 = vpop.f32.mrf.mxu0
        %v860 = vadd.f32 %v847, %v859
        %v861 = vpop.f32.mrf.mxu0
        %862 = vdwg.mxu0
        %v863 = vadd.f32 %v836, %v860
        %864 = vst [vmem:[%s574] sm:$0xff] %v863
        %s865 = sand.u32 %s268, 1
        %s866 = scalar_lea.sflag [#allocation4], %s865
        %s867 = sand.u32 %s268, 1
        %s868 = smul.addr %s867, 8
        %s869 = scalar_lea.vmem [#allocation11], %s868
        %s870 = sand.u32 %s298, 1
        %s871 = scalar_lea.sflag [#allocation13], %s870
        %s872 = sand.u32 %s298, 1
        %s873 = smul.addr %s872, 8
        %s874 = scalar_lea.vmem [#allocation12], %s873
        // Predicated region
        $region69: #{tpu_custom_call.1} parent=47 // pred_check
          %p875 = pneg %p278
        $region70: #{tpu_custom_call.1} parent=47 // pred_check_branch
          %877 = sbr.rel (%p875) target = $region72
        $region71: #{tpu_custom_call.1} parent=47 // pred_region
          %879 = vsyncadd %s866, 0
          %s880 = sadd.s32 %s42, %s40
          %s881 = sadd.s32 %s880, %s41
          %s882 = smul.addr %s881, 8
          %s883 = scalar_lea.hbm %s7, %s882
          %s885 = sshll.u32 %s869, 4
          %s886 = int_to_ptr.vmem [resolvable:$true] %s885
          %s887 = sshll.u32 %s883, 4
          %s888 = int_to_ptr.hbm [resolvable:$true] %s887
          %890 = dma.vmem_to_hbm [thread:$0]  %s886, 128, %s888, %s866
        $region72: #{tpu_custom_call.1} parent=47 // pred_fallthru
          _
        // Predicated region
        $region73: #{tpu_custom_call.1} parent=47 // pred_check
          %p891 = pneg %p308
        $region74: #{tpu_custom_call.1} parent=47 // pred_check_branch
          %893 = sbr.rel (%p891) target = $region76
        $region75: #{tpu_custom_call.1} parent=47 // pred_region
          %895 = vsyncadd %s871, 0
          %s896 = sadd.s32 %s42, %s40
          %s897 = sadd.s32 %s896, %s41
          %s898 = smul.addr %s897, 8
          %s899 = scalar_lea.hbm %s8, %s898
          %s901 = sshll.u32 %s874, 4
          %s902 = int_to_ptr.vmem [resolvable:$true] %s901
          %s903 = sshll.u32 %s899, 4
          %s904 = int_to_ptr.hbm [resolvable:$true] %s903
          %906 = dma.vmem_to_hbm [thread:$0]  %s902, 128, %s904, %s871
        $region76: #{tpu_custom_call.1} parent=47 // pred_fallthru
          _
      $region48: #{tpu_custom_call.1} parent=5 // pred_fallthru
        _
      %p907 = scmp.le.s32.totalorder 2, %s30
      // Predicated region
      $region77: #{tpu_custom_call.1} parent=5 // pred_check
        %p908 = pneg %p907
      $region78: #{tpu_custom_call.1} parent=5 // pred_check_branch
        %910 = sbr.rel (%p908) target = $region80
      $region79: #{tpu_custom_call.1} parent=5 // pred_region
        %s911 = ssub.s32 %s30, 2
        // Predicated region
        $region81: #{tpu_custom_call.1} parent=79 // pred_check
          %p912 = pneg %p284
        $region82: #{tpu_custom_call.1} parent=79 // pred_check_branch
          %914 = sbr.rel (%p912) target = $region84
        $region83: #{tpu_custom_call.1} parent=79 // pred_region
          %s915 = sand.u32 %s269, 1
          %s916 = scalar_lea.sflag [#allocation4], %s915
          %s917 = sand.u32 %s269, 1
          %s918 = smul.addr %s917, 8
          %s919 = scalar_lea.vmem [#allocation11], %s918
          %921 = dma.done %s916, 128
        $region84: #{tpu_custom_call.1} parent=79 // pred_fallthru
          _
        // Predicated region
        $region85: #{tpu_custom_call.1} parent=79 // pred_check
          %p922 = pneg %p314
        $region86: #{tpu_custom_call.1} parent=79 // pred_check_branch
          %924 = sbr.rel (%p922) target = $region88
        $region87: #{tpu_custom_call.1} parent=79 // pred_region
          %s925 = sand.u32 %s299, 1
          %s926 = scalar_lea.sflag [#allocation13], %s925
          %s927 = sand.u32 %s299, 1
          %s928 = smul.addr %s927, 8
          %s929 = scalar_lea.vmem [#allocation12], %s928
          %931 = dma.done %s926, 128
        $region88: #{tpu_custom_call.1} parent=79 // pred_fallthru
          _
      $region80: #{tpu_custom_call.1} parent=5 // pred_fallthru
        _
    $region6: #{tpu_custom_call.1} parent=1 // loop_footer
      %s34 = sadd.s32 1, %s30
    $region7: #{tpu_custom_call.1} parent=1 // loop_footer_branch
      %29 = sbr.rel target = $region3
    $region8: #{tpu_custom_call.1} parent=1 // loop_exit
      _
    %932 = vsyncpa [#allocation3], 1
    %s933 = scalar_lea.sflag [#allocation3], 1
    %934 = vsyncpa %s933, 1
    %935 = vsyncpa [#allocation6], 1
    %s936 = scalar_lea.sflag [#allocation6], 1
    %937 = vsyncpa %s936, 1
    %938 = vsyncpa [#allocation9], 1
    %s939 = scalar_lea.sflag [#allocation9], 1
    %940 = vsyncpa %s939, 1
    %941 = vsyncpa [#allocation4], 1
    %s942 = scalar_lea.sflag [#allocation4], 1
    %943 = vsyncpa %s942, 1
    %944 = vsyncpa [#allocation13], 1
    %s945 = scalar_lea.sflag [#allocation13], 1
    %946 = vsyncpa %s945, 1

</llo_original>
